<compile_context>
chip_gen: v7x
topology: tpu7x:2x2x1
jax: 0.10.0
libtpu: 0.0.40
codegen_flags: <defaults>
</compile_context>

<pallas_src>
import jax
import jax.numpy as jnp
from jax import lax
from jax.experimental import pallas as pl
from jax.experimental.pallas import tpu as pltpu

_LANE = 128


def _cdiv(a, b):
    return -(-a // b)


def _round_up(a, b):
    return _cdiv(a, b) * b


def _tpu_config():
    """(n_cores, max_tile_rows, buffer_depth) tuned per chip generation."""
    try:
        kind = jax.devices()[0].device_kind.lower()
    except Exception:
        kind = ""
    if ("v7" in kind) or ("7x" in kind):
        # v7x: 2 TensorCores/chip, ~3.2 TB/s HBM -> bigger tiles + deeper pipeline
        # (2048x128 f32 = 1 MiB/block x 2 streams x 3 buffers = 6 MiB VMEM).
        return 2, 2048, 3
    # v5e / v6e: single TensorCore; 1024-row tiles already sit near HBM roofline.
    return 1, 1024, 2


def _make_bce_sum_kernel(rows_valid, tile_r, tiles_per_core, may_need_mask):
    """Masked, numerically stable BCE-with-logits sum into an (8,128) accumulator."""

    def kernel(x_ref, y_ref, out_ref):
        c = pl.program_id(0)   # per-core partial-sum index
        i = pl.program_id(1)   # tile index within this core's range

        @pl.when(i == 0)
        def _():
            out_ref[...] = jnp.zeros_like(out_ref)

        x = x_ref[...].astype(jnp.float32)
        y = y_ref[...].astype(jnp.float32)
        # Stable BCE-with-logits: max(x,0) - x*y + log(1 + exp(-|x|)).
        term = jnp.maximum(x, 0.0) - x * y + jnp.log(1.0 + jnp.exp(-jnp.abs(x)))

        # Intended (unclamped) block index; row-based so int32 math is safe.
        blk = c * tiles_per_core + i

        def accumulate(t):
            # Layout-preserving reshape -> pure VPU vreg adds; the single
            # cross-lane reduce happens once in the wrapper.
            out_ref[...] += t.reshape(tile_r // 8, 8, _LANE).sum(axis=0)

        if may_need_mask:
            # True only for the partial last tile and for clamped over-range
            # (redundant re-read) blocks; interior tiles skip the mask entirely.
            needs_mask = (blk + 1) * tile_r > rows_valid

            @pl.when(jnp.logical_not(needs_mask))
            def _():
                accumulate(term)

            @pl.when(needs_mask)
            def _():
                row_ids = lax.broadcasted_iota(jnp.int32, (tile_r, _LANE), 0)
                valid = (blk * tile_r + row_ids) < rows_valid
                accumulate(jnp.where(valid, term, 0.0))
        else:
            accumulate(term)

    return kernel


def _bce_with_logits_mean(pred, target):
    """Mean BCE-with-logits over all elements via a Pallas reduction kernel."""
    n = pred.size
    n_cores, max_tile_r, buf_depth = _tpu_config()

    x = pred.reshape(-1)
    y = target.reshape(-1)

    rows = n // _LANE
    rem = n - rows * _LANE

    # Ragged (<128 element) tail: tiny jnp expression instead of jnp.pad-ing
    # (i.e. fully copying) both streams in HBM.
    tail_sum = jnp.float32(0.0)
    if rem:
        xt = lax.slice(x, (rows * _LANE,), (n,)).astype(jnp.float32)
        yt = lax.slice(y, (rows * _LANE,), (n,)).astype(jnp.float32)
        tail_sum = jnp.sum(
            jnp.maximum(xt, 0.0) - xt * yt + jnp.log1p(jnp.exp(-jnp.abs(xt))))

    if rows == 0:
        return tail_sum / jnp.float32(n)

    if rem:
        x2 = lax.slice(x, (0,), (rows * _LANE,)).reshape(rows, _LANE)
        y2 = lax.slice(y, (0,), (rows * _LANE,)).reshape(rows, _LANE)
    else:
        x2 = x.reshape(rows, _LANE)   # free reshape, no copy
        y2 = y.reshape(rows, _LANE)

    tile_r = min(max_tile_r, _round_up(rows, 8))
    tiles_total = _cdiv(rows, tile_r)
    tiles_per_core = _cdiv(tiles_total, n_cores)

    need_clamp = tiles_per_core * n_cores != tiles_total
    may_need_mask = (rows % tile_r != 0) or need_clamp

    if need_clamp:
        def in_map(c, i):
            # Clamp so no block starts fully out of bounds; the in-kernel mask
            # (built from the unclamped index) zeroes the redundant re-read.
            return (jnp.minimum(c * tiles_per_core + i, tiles_total - 1), 0)
    else:
        def in_map(c, i):
            return (c * tiles_per_core + i, 0)

    block_kwargs = {}
    if buf_depth != 2:
        block_kwargs["pipeline_mode"] = pl.Buffered(buf_depth)
    tile_spec = pl.BlockSpec((tile_r, _LANE), in_map, **block_kwargs)

    if n_cores > 1:
        # Explicit two-TensorCore split on v7x (one accumulator block per core).
        dim_sem = (pltpu.CORE_PARALLEL, pltpu.ARBITRARY)
    else:
        dim_sem = ("arbitrary", "arbitrary")

    n_elems = rows * _LANE
    cost = pl.CostEstimate(
        flops=8 * n_elems,
        transcendentals=2 * n_elems,
        bytes_accessed=(x2.size * x2.dtype.itemsize
                        + y2.size * y2.dtype.itemsize
                        + n_cores * 8 * _LANE * 4),
    )

    partials = pl.pallas_call(
        _make_bce_sum_kernel(rows, tile_r, tiles_per_core, may_need_mask),
        out_shape=jax.ShapeDtypeStruct((n_cores * 8, _LANE), jnp.float32),
        grid_spec=pltpu.PrefetchScalarGridSpec(
            num_scalar_prefetch=0,
            grid=(n_cores, tiles_per_core),
            in_specs=[tile_spec, tile_spec],
            out_specs=pl.BlockSpec((8, _LANE), lambda c, i: (c, 0)),
        ),
        compiler_params=pltpu.CompilerParams(dimension_semantics=dim_sem),
        cost_estimate=cost,
    )(x2, y2)

    return (jnp.sum(partials) + tail_sum) / jnp.float32(n)


def _interp_matrix(in_size, out_size):
    """1-D bilinear interpolation matrix (align_corners=False), PyTorch semantics."""
    scale = in_size / out_size
    src = (jnp.arange(out_size, dtype=jnp.float32) + 0.5) * scale - 0.5
    src = jnp.maximum(src, 0.0)
    i0 = jnp.clip(jnp.floor(src).astype(jnp.int32), 0, in_size - 1)
    i1 = jnp.minimum(i0 + 1, in_size - 1)
    w1 = src - i0.astype(jnp.float32)
    w0 = 1.0 - w1
    r = jnp.arange(out_size)
    mat = jnp.zeros((out_size, in_size), jnp.float32)
    mat = mat.at[r, i0].add(w0)
    mat = mat.at[r, i1].add(w1)
    return mat


def _bilinear_resize_nchw(x, out_h, out_w, out_dtype):
    """F.interpolate(mode='bilinear', align_corners=False) as two MXU matmuls (glue)."""
    _, _, h, w = x.shape
    wy = _interp_matrix(h, out_h)   # (out_h, h)
    wx = _interp_matrix(w, out_w)   # (out_w, w)
    xf = x.astype(jnp.float32)
    out = jnp.einsum('oh,nchw->ncow', wy, xf)
    out = jnp.einsum('ncow,pw->ncop', out, wx)
    # Keep floating targets in their own dtype (no-op cast skipped); never
    # truncate bilinear weights back to an int/bool mask dtype.
    if jnp.issubdtype(jnp.dtype(out_dtype), jnp.floating) and jnp.dtype(out_dtype) != jnp.float32:
        out = out.astype(out_dtype)
    return out


def segmentation_loss(pred_segs, target_segs, loss_type="bce_with_logits"):
    """Forward pass of SegmentationLoss."""
    assert loss_type == "bce_with_logits"
    if isinstance(pred_segs, (list, tuple)):
        pred_segs = jnp.concatenate(list(pred_segs), axis=0)
        target_segs = jnp.concatenate(list(target_segs), axis=0)
    if target_segs.shape[2:4] != pred_segs.shape[2:4]:
        target_segs = _bilinear_resize_nchw(
            target_segs, pred_segs.shape[2], pred_segs.shape[3],
            out_dtype=target_segs.dtype)
    return _bce_with_logits_mean(pred_segs, target_segs)


def _reference_loss(pred, target):
    x = pred.astype(jnp.float32)
    y = target.astype(jnp.float32)
    term = jnp.maximum(x, 0.0) - x * y + jnp.log1p(jnp.exp(-jnp.abs(x)))
    return jnp.mean(term)


if __name__ == "__main__":
    key = jax.random.PRNGKey(0)
    k1, k2, k3, k4, k5, k6 = jax.random.split(key, 6)

    # Case 1: lane-aligned element count (2*4*16*16 = 2048).
    pred = jax.random.normal(k1, (2, 4, 16, 16), dtype=jnp.float32)
    target = jax.random.uniform(k2, (2, 4, 16, 16), dtype=jnp.float32)
    loss = jax.block_until_ready(segmentation_loss(pred, target))
    ref = _reference_loss(pred, target)
    assert jnp.allclose(loss, ref, rtol=1e-5, atol=1e-5), (loss, ref)

    # Case 2: ragged element count (2*3*20*20 = 2400) -> masked last tile + jnp tail.
    pred2 = jax.random.normal(k3, (2, 3, 20, 20), dtype=jnp.float32)
    target2 = jax.random.uniform(k4, (2, 3, 20, 20), dtype=jnp.float32)
    loss2 = jax.block_until_ready(segmentation_loss(pred2, target2))
    ref2 = _reference_loss(pred2, target2)
    assert jnp.allclose(loss2, ref2, rtol=1e-5, atol=1e-5), (loss2, ref2)

    # Case 3: list inputs + bilinear-resized target (exercises the glue path).
    preds = [jax.random.normal(k5, (1, 2, 16, 16), dtype=jnp.float32),
             jax.random.normal(k6, (1, 2, 16, 16), dtype=jnp.float32)]
    targets = [jax.random.uniform(k5, (1, 2, 8, 8), dtype=jnp.float32),
               jax.random.uniform(k6, (1, 2, 8, 8), dtype=jnp.float32)]
    loss3 = jax.block_until_ready(segmentation_loss(preds, targets))
    pred3 = jnp.concatenate(preds, axis=0)
    tgt3 = _bilinear_resize_nchw(jnp.concatenate(targets, axis=0), 16, 16,
                                 out_dtype=jnp.float32)
    ref3 = _reference_loss(pred3, tgt3)
    assert jnp.allclose(loss3, ref3, rtol=1e-5, atol=1e-5), (loss3, ref3)

    print("KERNEL_OK")
</pallas_src>

<mosaic_0001>
module attributes {stable_mosaic.version = 11 : i64} {
  func.func @kernel(%arg0: i32, %arg1: i32, %arg2: memref<16x128xf32, #tpu.memory_space<vmem>>, %arg3: memref<16x128xf32, #tpu.memory_space<vmem>>, %arg4: memref<8x128xf32, #tpu.memory_space<vmem>>) attributes {dimension_semantics = [#tpu.dimension_semantics<arbitrary>, #tpu.dimension_semantics<arbitrary>], iteration_bounds = array<i64: 1, 1>, scalar_prefetch = 0 : i64, scratch_operands = 0 : i64, tpu.core_type = #tpu.core_type<tc>, window_params = [{transform_indices = @transform_0, window_bounds = array<i64: 16, 128>}, {transform_indices = @transform_1, window_bounds = array<i64: 16, 128>}, {transform_indices = @transform_2, window_bounds = array<i64: 8, 128>}]} {
    %c0_i32 = arith.constant 0 : i32
    %0 = arith.cmpi eq, %arg1, %c0_i32 : i32
    %1 = arith.extui %0 : i1 to i32
    %c0_i32_0 = arith.constant 0 : i32
    %2 = arith.cmpi ne, %1, %c0_i32_0 : i32
    scf.if %2 {
      %cst_11 = arith.constant 0.000000e+00 : f32
      %22 = vector.broadcast %cst_11 : f32 to vector<8x128xf32>
      %c0_12 = arith.constant 0 : index
      %c0_13 = arith.constant 0 : index
      %23 = vector.load %arg4[%c0_12, %c0_13] : memref<8x128xf32, #tpu.memory_space<vmem>>, vector<8x128xf32>
      tpu.vector_store %arg4[%c0_12, %c0_13], %22 {strides = array<i32>} : memref<8x128xf32, #tpu.memory_space<vmem>>, vector<8x128xf32>,
    } else {
    }
    %c0 = arith.constant 0 : index
    %c0_1 = arith.constant 0 : index
    %3 = vector.load %arg2[%c0, %c0_1] : memref<16x128xf32, #tpu.memory_space<vmem>>, vector<16x128xf32>
    %c0_2 = arith.constant 0 : index
    %c0_3 = arith.constant 0 : index
    %4 = vector.load %arg3[%c0_2, %c0_3] : memref<16x128xf32, #tpu.memory_space<vmem>>, vector<16x128xf32>
    %cst = arith.constant 0.000000e+00 : f32
    %5 = vector.broadcast %cst : f32 to vector<16x128xf32>
    %6 = arith.maximumf %3, %5 : vector<16x128xf32>
    %7 = arith.mulf %3, %4 : vector<16x128xf32>
    %8 = arith.subf %6, %7 : vector<16x128xf32>
    %9 = math.absf %3 : vector<16x128xf32>
    %cst_4 = arith.constant 0.000000e+00 : f32
    %10 = vector.broadcast %cst_4 : f32 to vector<16x128xf32>
    %11 = arith.subf %10, %9 : vector<16x128xf32>
    %12 = math.exp %11 : vector<16x128xf32>
    %cst_5 = arith.constant 1.000000e+00 : f32
    %13 = vector.broadcast %cst_5 : f32 to vector<16x128xf32>
    %14 = arith.addf %13, %12 : vector<16x128xf32>
    %15 = math.log %14 : vector<16x128xf32>
    %16 = arith.addf %8, %15 : vector<16x128xf32>
    %c0_6 = arith.constant 0 : index
    %c0_7 = arith.constant 0 : index
    %17 = vector.load %arg4[%c0_6, %c0_7] : memref<8x128xf32, #tpu.memory_space<vmem>>, vector<8x128xf32>
    %18 = vector.shape_cast %16 : vector<16x128xf32> to vector<2x8x128xf32>
    %cst_8 = arith.constant dense<0.000000e+00> : vector<8x128xf32>
    %19 = vector.multi_reduction <add>, %18, %cst_8 [0] : vector<2x8x128xf32> to vector<8x128xf32>
    %20 = arith.addf %17, %19 : vector<8x128xf32>
    %c0_9 = arith.constant 0 : index
    %c0_10 = arith.constant 0 : index
    %21 = vector.load %arg4[%c0_9, %c0_10] : memref<8x128xf32, #tpu.memory_space<vmem>>, vector<8x128xf32>
    tpu.vector_store %arg4[%c0_9, %c0_10], %20 {strides = array<i32>} : memref<8x128xf32, #tpu.memory_space<vmem>>, vector<8x128xf32>,
    return
  }
  func.func @transform_0(%arg0: i32, %arg1: i32) -> (i32, i32) {
    %c1_i32 = arith.constant 1 : i32
    %0 = arith.muli %arg0, %c1_i32 : i32
    %1 = arith.addi %0, %arg1 : i32
    %c0_i32 = arith.constant 0 : i32
    %c0_i32_0 = arith.constant 0 : i32
    return %1, %c0_i32 : i32, i32
  }
  func.func @transform_1(%arg0: i32, %arg1: i32) -> (i32, i32) {
    %c1_i32 = arith.constant 1 : i32
    %0 = arith.muli %arg0, %c1_i32 : i32
    %1 = arith.addi %0, %arg1 : i32
    %c0_i32 = arith.constant 0 : i32
    %c0_i32_0 = arith.constant 0 : i32
    return %1, %c0_i32 : i32, i32
  }
  func.func @transform_2(%arg0: i32, %arg1: i32) -> (i32, i32) {
    %c0_i32 = arith.constant 0 : i32
    %c0_i32_0 = arith.constant 0 : i32
    return %arg0, %c0_i32 : i32, i32
  }
}

</mosaic_0001>

<llo_original>
// kernel: tpu_custom_call.1
$region0: #{tpu_custom_call.1}
  #allocation0 [shape = 'u32[]', space=smem, size = 0x4, offset = 0x4, fixed_abs, tag = 'smem constant byte address 0x4 - core index']
  #allocation1 [shape = 'u32[144,128]{1,0:T(1,128)}', space=vmem, size = 0x12000, scoped, tag = 'internal scratch']
  %s0 = inlined_call_operand.hbm [shape: f32[16,128], index: 0, kind: input, shape index: {}]
  %s1 = inlined_call_operand.hbm [shape: f32[16,128], index: 1, kind: input, shape index: {}]
  %s2 = inlined_call_operand.hbm [shape: f32[8,128], index: 2, kind: output, shape index: {}]
  %s3 = sld [smem:[#allocation0]]
  $region30: #{tpu_custom_call.1} parent=0
    _
  %s5 = ssub.s32 1, %s3
  %s6 = scalar_select 0, %s5, %s3
  $region1: #{tpu_custom_call.1} parent=0
    #allocation2 [shape = 'u8[8192]{0}', space=vmem, size = 0x2000, scoped, tag = 'input window, operand 0, single buffered']
    #allocation3 [shape = 's32[1]{0}', space=sflag, size = 0x4, scoped, tag = 'scoped memory for tpu_custom_call.1']
    #allocation4 [shape = 's32[1]{0}', space=sflag, size = 0x4, scoped, tag = 'scoped memory for tpu_custom_call.1']
    #allocation5 [shape = 'u8[8192]{0}', space=vmem, size = 0x2000, scoped, tag = 'input window, operand 1, single buffered']
    #allocation6 [shape = 's32[1]{0}', space=sflag, size = 0x4, scoped, tag = 'scoped memory for tpu_custom_call.1']
    #allocation7 [shape = 'u8[4096]{0}', space=vmem, size = 0x1000, scoped, tag = 'output window, operand 0, single buffered']
    %7 = vsyncpa [#allocation3], 0
    %8 = vsyncpa [#allocation6], 0
    %9 = vsyncpa [#allocation4], 0
    // Predicated region
    $region2: #{tpu_custom_call.1} parent=1 // pred_check
      _
    $region3: #{tpu_custom_call.1} parent=1 // pred_check_branch
      %11 = sbr.rel (0) target = $region5
    $region4: #{tpu_custom_call.1} parent=1 // pred_region
      %s12 = sadd.s32 0, 0
      %s13 = smul.u32 2, %s12
      %s15 = ssub.s32 256, 256
      %16 = vsyncadd [#allocation3], %s15
      %s17 = smul.addr %s13, 128
      %s18 = scalar_lea.hbm %s0, %s17
      %s19 = sshll.u32 [#allocation2], 4
      %s20 = int_to_ptr.vmem [resolvable:$true] %s19
      %25 = dma.hbm_to_vmem [thread:$0]  %s18, 256, %s20, [#allocation3], 128, 128, 8
    $region5: #{tpu_custom_call.1} parent=1 // pred_fallthru
      _
    // Predicated region
    $region6: #{tpu_custom_call.1} parent=1 // pred_check
      _
    $region7: #{tpu_custom_call.1} parent=1 // pred_check_branch
      %27 = sbr.rel (0) target = $region9
    $region8: #{tpu_custom_call.1} parent=1 // pred_region
      %s28 = sadd.s32 0, 0
      %s29 = smul.u32 2, %s28
      %s31 = ssub.s32 256, 256
      %32 = vsyncadd [#allocation6], %s31
      %s33 = smul.addr %s29, 128
      %s34 = scalar_lea.hbm %s1, %s33
      %s35 = sshll.u32 [#allocation5], 4
      %s36 = int_to_ptr.vmem [resolvable:$true] %s35
      %41 = dma.hbm_to_vmem [thread:$0]  %s34, 256, %s36, [#allocation6], 128, 128, 8
    $region9: #{tpu_custom_call.1} parent=1 // pred_fallthru
      _
    // Predicated region
    $region10: #{tpu_custom_call.1} parent=1 // pred_check
      _
    $region11: #{tpu_custom_call.1} parent=1 // pred_check_branch
      %43 = sbr.rel (0) target = $region13
    $region12: #{tpu_custom_call.1} parent=1 // pred_region
      %44 = dma.done [#allocation3], 256
    $region13: #{tpu_custom_call.1} parent=1 // pred_fallthru
      _
    // Predicated region
    $region14: #{tpu_custom_call.1} parent=1 // pred_check
      _
    $region15: #{tpu_custom_call.1} parent=1 // pred_check_branch
      %46 = sbr.rel (0) target = $region17
    $region16: #{tpu_custom_call.1} parent=1 // pred_region
      %47 = dma.done [#allocation6], 256
    $region17: #{tpu_custom_call.1} parent=1 // pred_fallthru
      _
    %s48 = sadd.s32 0, 0
    %s49 = smul.u32 2, %s48
    %s50 = sadd.s32 0, 0
    %s51 = smul.u32 2, %s50
    %p52 = scmp.eq.s32.totalorder 0, 0
    // Predicated region
    $region18: #{tpu_custom_call.1} parent=1 // pred_check
      %p53 = pneg %p52
    $region19: #{tpu_custom_call.1} parent=1 // pred_check_branch
      %55 = sbr.rel (%p53) target = $region21
    $region20: #{tpu_custom_call.1} parent=1 // pred_region
      %56 = vst [vmem:[#allocation7] sm:$0xff] 0.0
    $region21: #{tpu_custom_call.1} parent=1 // pred_fallthru
      _
    %v57 = vld [vmem:[#allocation2] sm:$0xff]
    %v58 = vld [vmem:[#allocation2 + $0x8] sm:$0xff]
    %v59 = vld [vmem:[#allocation5] sm:$0xff]
    %v60 = vld [vmem:[#allocation5 + $0x8] sm:$0xff]
    %v61 = vmax.f32 %v57, 0.0
    %v62 = vmax.f32 %v58, 0.0
    %v63 = vmul.f32 %v57, %v59
    %v64 = vmul.f32 %v58, %v60
    %v65 = vsub.f32 %v61, %v63
    %v66 = vsub.f32 %v62, %v64
    %v67 = vand.u32 2147483647, %v57
    %v68 = vand.u32 2147483647, %v58
    %v69 = vsub.f32 0.0, %v67
    %v70 = vsub.f32 0.0, %v68
    %v71 = vmul.f32 %v69, 1.442695
    %v72 = vpow.pop %v71
    %v73 = vmul.f32 %v70, 1.442695
    %v74 = vpow.pop %v73
    %v75 = vadd.f32 %v72, 1.0
    %v76 = vadd.f32 %v74, 1.0
    %v77 = vlog2.pop %v75
    %v78 = vmul.f32 %v77, 0.6931472
    %v79 = vlog2.pop %v76
    %v80 = vmul.f32 %v79, 0.6931472
    %v81 = vadd.f32 %v65, %v78
    %v82 = vadd.f32 %v66, %v80
    %v83 = vld [vmem:[#allocation7] sm:$0xff]
    %v84 = vadd.f32 %v81, %v82
    %v85 = vadd.f32 %v83, %v84
    %86 = vst [vmem:[#allocation7] sm:$0xff] %v85
    // Predicated region
    $region22: #{tpu_custom_call.1} parent=1 // pred_check
      _
    $region23: #{tpu_custom_call.1} parent=1 // pred_check_branch
      %88 = sbr.rel (0) target = $region25
    $region24: #{tpu_custom_call.1} parent=1 // pred_region
      %s90 = ssub.s32 128, 128
      %91 = vsyncadd [#allocation4], %s90
      %s93 = sshll.u32 [#allocation7], 4
      %s94 = int_to_ptr.vmem [resolvable:$true] %s93
      %96 = dma.vmem_to_hbm [thread:$0]  %s94, 128, %s2, [#allocation4]
    $region25: #{tpu_custom_call.1} parent=1 // pred_fallthru
      _
    // Predicated region
    $region26: #{tpu_custom_call.1} parent=1 // pred_check
      _
    $region27: #{tpu_custom_call.1} parent=1 // pred_check_branch
      %98 = sbr.rel (0) target = $region29
    $region28: #{tpu_custom_call.1} parent=1 // pred_region
      %99 = dma.done [#allocation4], 128
    $region29: #{tpu_custom_call.1} parent=1 // pred_fallthru
      _
    %100 = vsyncpa [#allocation3], 1
    %101 = vsyncpa [#allocation6], 1
    %102 = vsyncpa [#allocation4], 1

</llo_original>
